<compile_context>
chip_gen: v7x
topology: tpu7x:2x2x1
jax: 0.10.0
libtpu: 0.0.40
codegen_flags: <defaults>
</compile_context>

<pallas_src>
import math

import jax
import jax.numpy as jnp
from jax.experimental import pallas as pl
from jax.experimental.pallas import tpu as pltpu


# ---------------------------------------------------------------------------
# Kernels
# ---------------------------------------------------------------------------

def _matmul_bias_kernel(x_ref, w_ref, b_ref, o_ref, acc_ref):
    """Plain tiled matmul + bias (weights pre-selected outside the kernel)."""
    i = pl.program_id(2)                       # contraction (I) axis is LAST

    @pl.when(i == 0)
    def _():
        acc_ref[...] = jnp.zeros_like(acc_ref)

    acc_ref[...] += jnp.dot(x_ref[...], w_ref[...],
                            preferred_element_type=jnp.float32)

    @pl.when(i == pl.num_programs(2) - 1)
    def _():
        o_ref[...] = (acc_ref[...] + b_ref[...]).astype(o_ref.dtype)


def _select_matmul_bias_kernel(x_ref, aw_ref, idx_ref, b_ref, o_ref, acc_ref):
    """In-kernel K-way select from a precomputed int8 argmax index, then matmul.

    The int8 index replaces the f32 score stream (1 byte vs 4K bytes per weight
    element) while keeping the selection bit-identical to torch.argmax."""
    i = pl.program_id(2)

    @pl.when(i == 0)
    def _():
        acc_ref[...] = jnp.zeros_like(acc_ref)

    K = aw_ref.shape[0]
    sel = idx_ref[...].astype(jnp.int32)       # (TI, TO)
    best_w = aw_ref[0]                         # (TI, TO) bf16
    for k in range(1, K):                      # K small & static -> unrolled
        best_w = jnp.where(sel == k, aw_ref[k], best_w)   # one bf16 select per k

    acc_ref[...] += jnp.dot(x_ref[...], best_w,
                            preferred_element_type=jnp.float32)

    @pl.when(i == pl.num_programs(2) - 1)
    def _():
        o_ref[...] = (acc_ref[...] + b_ref[...]).astype(o_ref.dtype)


# ---------------------------------------------------------------------------
# One-time parameter preparation (hoisted out of the per-forward path)
# ---------------------------------------------------------------------------

def prepare_selected_weight(all_weights, weight_scores, weight_dtype=jnp.bfloat16):
    """PREFERRED: selection depends only on scores, so do it once here.

    torch layout (O, I, K) -> single (I, O) weight in `weight_dtype`.
    argmax/gather run in exact f32 (first-max tie-break == torch.argmax)."""
    idx = jnp.argmax(weight_scores, axis=-1)                               # (O, I)
    w = jnp.take_along_axis(all_weights, idx[..., None], axis=-1)[..., 0]  # (O, I)
    return jnp.transpose(w).astype(weight_dtype)                           # (I, O)


def prepare_selection_params(all_weights, weight_scores, weight_dtype=jnp.bfloat16):
    """ALTERNATE (scores change between calls): keep all K candidates in the
    canonical (K, I, O) layout and precompute an int8 argmax index (I, O)."""
    aw = jnp.transpose(all_weights, (2, 1, 0)).astype(weight_dtype)        # (K, I, O)
    idx = jnp.argmax(weight_scores, axis=-1).astype(jnp.int8)              # (O, I)
    return aw, jnp.transpose(idx)                                          # (I, O) int8


# ---------------------------------------------------------------------------
# Tiling / VMEM budget helpers
# ---------------------------------------------------------------------------

def _pick_tiles(B, I, O, tile_b, tile_o, tile_i):
    tb = min(tile_b, B)
    if B % tb != 0:
        tb = B   # TODO(synk): no ragged-batch tiling; odd batches run as one block
    to = min(tile_o, O)
    ti = min(tile_i, I)
    assert O % to == 0 and I % ti == 0, "O and I must be divisible by the tile sizes"
    # v7x has 2 TensorCores: ensure >=2 blocks on the 'parallel' O axis when possible.
    while O // to < 2 and to > 128 and to % 2 == 0 and O % (to // 2) == 0:
        to //= 2
    return tb, to, ti


def _vmem_limit_bytes(per_step_in_bytes, per_step_out_bytes, scratch_bytes):
    # Double-buffered inputs/outputs + persistent scratch, 2x margin for compiler
    # internals, floored at the 32 MiB default and capped at 48 MiB so the limit
    # never equals/exceeds v7x's 64 MiB of physical VMEM per TensorCore.
    footprint = 2 * (per_step_in_bytes + per_step_out_bytes) + scratch_bytes
    return int(min(48 * 1024 * 1024, max(32 * 1024 * 1024, 2 * footprint)))


# ---------------------------------------------------------------------------
# pallas_call wrappers
# ---------------------------------------------------------------------------

def linear_sm_matmul(x, w_io, bias, *, tile_b=256, tile_o=512, tile_i=1024,
                     out_dtype=jnp.float32, weight_buffers=2):
    """y = x @ W + bias with W = (I, O) weight from prepare_selected_weight."""
    B, I = x.shape
    I2, O = w_io.shape
    assert I2 == I, "weight layout must be (I, O)"
    tb, to, ti = _pick_tiles(B, I, O, tile_b, tile_o, tile_i)
    grid = (B // tb, O // to, I // ti)         # reduction (I) axis LAST

    xb = x.astype(w_io.dtype)
    b2 = bias.reshape(1, O).astype(jnp.float32)

    w_spec_kwargs = {}
    if weight_buffers != 2:                    # optional deeper pipelining to sweep
        w_spec_kwargs["pipeline_mode"] = pl.Buffered(weight_buffers)

    w_item = jnp.dtype(w_io.dtype).itemsize
    in_bytes = tb * ti * w_item + ti * to * w_item + to * 4
    out_bytes = tb * to * jnp.dtype(out_dtype).itemsize
    scratch_bytes = tb * to * 4

    return pl.pallas_call(
        _matmul_bias_kernel,
        out_shape=jax.ShapeDtypeStruct((B, O), out_dtype),
        grid_spec=pltpu.PrefetchScalarGridSpec(
            num_scalar_prefetch=0,
            grid=grid,
            in_specs=[
                pl.BlockSpec((tb, ti), lambda b, j, i: (b, i)),                   # x
                pl.BlockSpec((ti, to), lambda b, j, i: (i, j), **w_spec_kwargs),  # W
                pl.BlockSpec((1, to), lambda b, j, i: (0, j)),                    # bias
            ],
            out_specs=pl.BlockSpec((tb, to), lambda b, j, i: (b, j)),
            scratch_shapes=[pltpu.VMEM((tb, to), jnp.float32)],
        ),
        compiler_params=pltpu.CompilerParams(
            dimension_semantics=("parallel", "parallel", "arbitrary"),
            vmem_limit_bytes=_vmem_limit_bytes(in_bytes, out_bytes, scratch_bytes),
        ),
    )(xb, w_io, b2)


def linear_sm_forward_select(x, aw_kio, idx_io, bias, *, tile_b=256, tile_o=512,
                             tile_i=1024, out_dtype=jnp.float32):
    """Alternate forward: in-kernel selection from an int8 index (scores may change
    between calls); aw_kio/idx_io come from prepare_selection_params."""
    B, I = x.shape
    K, I2, O = aw_kio.shape
    assert I2 == I and idx_io.shape == (I, O)
    tb, to, ti = _pick_tiles(B, I, O, tile_b, tile_o, tile_i)
    grid = (B // tb, O // to, I // ti)

    xb = x.astype(aw_kio.dtype)
    b2 = bias.reshape(1, O).astype(jnp.float32)

    w_item = jnp.dtype(aw_kio.dtype).itemsize
    in_bytes = tb * ti * w_item + K * ti * to * w_item + ti * to * 1 + to * 4
    out_bytes = tb * to * jnp.dtype(out_dtype).itemsize
    scratch_bytes = tb * to * 4

    return pl.pallas_call(
        _select_matmul_bias_kernel,
        out_shape=jax.ShapeDtypeStruct((B, O), out_dtype),
        grid_spec=pltpu.PrefetchScalarGridSpec(
            num_scalar_prefetch=0,
            grid=grid,
            in_specs=[
                pl.BlockSpec((tb, ti), lambda b, j, i: (b, i)),        # x       (TB, TI)
                pl.BlockSpec((K, ti, to), lambda b, j, i: (0, i, j)),  # weights (K, TI, TO)
                pl.BlockSpec((ti, to), lambda b, j, i: (i, j)),        # idx     (TI, TO) i8
                pl.BlockSpec((1, to), lambda b, j, i: (0, j)),         # bias    (1, TO)
            ],
            out_specs=pl.BlockSpec((tb, to), lambda b, j, i: (b, j)),
            scratch_shapes=[pltpu.VMEM((tb, to), jnp.float32)],
        ),
        compiler_params=pltpu.CompilerParams(
            dimension_semantics=("parallel", "parallel", "arbitrary"),
            vmem_limit_bytes=_vmem_limit_bytes(in_bytes, out_bytes, scratch_bytes),
        ),
    )(xb, aw_kio, idx_io, b2)


def linear_sm_forward(x, all_weights, weight_scores, bias, **tile_kwargs):
    """Exact per-call semantics of Linear_SM.forward (GS path): select, then linear.
    For repeated forwards with unchanged scores, call prepare_selected_weight once
    and reuse linear_sm_matmul directly (the selection is score-only)."""
    w_io = prepare_selected_weight(all_weights, weight_scores)
    return linear_sm_matmul(x, w_io, bias, **tile_kwargs)


# ---------------------------------------------------------------------------
# Pure-JAX references
# ---------------------------------------------------------------------------

def reference_forward_f32(x, all_weights, weight_scores, bias):
    """Torch-equivalent math in full f32 (no bf16 rounding)."""
    idx = jnp.argmax(weight_scores, axis=-1)                              # (O, I)
    W = jnp.take_along_axis(all_weights, idx[..., None], -1)[..., 0]      # (O, I)
    return jnp.dot(x, W.T) + bias[None, :]


def reference_forward_bf16(x, all_weights, weight_scores, bias):
    """Same math with the kernel's bf16-operand / f32-accumulate numerics."""
    idx = jnp.argmax(weight_scores, axis=-1)
    W = jnp.take_along_axis(all_weights, idx[..., None], -1)[..., 0].astype(jnp.bfloat16)
    y = jnp.dot(x.astype(jnp.bfloat16), W.T, preferred_element_type=jnp.float32)
    return y + bias[None, :]


if __name__ == "__main__":
    # Small shapes consistent with the module, sized so the (8,128) tiling and the
    # 3-axis grid are exercised: grid = (1, O/128, I/128) = (1, 2, 2).
    in_features, out_features, K, batch = 256, 256, 4, 8

    key = jax.random.PRNGKey(0)
    k_x, k_aw, k_ws, k_b = jax.random.split(key, 4)

    # Deterministic init mirroring __init__:
    fan_in, fan_out = in_features, out_features
    std = math.sqrt(2.0 / float(fan_in + fan_out))
    all_weights = jax.random.uniform(
        k_aw, (out_features, in_features, K), jnp.float32, minval=-std, maxval=std)
    weight_scores = jax.random.uniform(
        k_ws, (out_features, in_features, K), jnp.float32, minval=0.0, maxval=std * 0.1)
    bound = 1.0 / math.sqrt(fan_in)
    bias = jax.random.uniform(
        k_b, (out_features,), jnp.float32, minval=-bound, maxval=bound)

    x = jax.random.normal(k_x, (batch, in_features), jnp.float32)

    tiles = dict(tile_b=256, tile_o=128, tile_i=128)

    # --- Primary path: selection hoisted once; kernel is a plain tiled matmul. ---
    w_io = prepare_selected_weight(all_weights, weight_scores)
    out1 = jax.block_until_ready(linear_sm_matmul(x, w_io, bias, **tiles))

    # --- Alternate path: in-kernel select from precomputed int8 index. ---
    aw_kio, idx_io = prepare_selection_params(all_weights, weight_scores)
    out2 = jax.block_until_ready(
        linear_sm_forward_select(x, aw_kio, idx_io, bias, **tiles))

    ref_bf16 = reference_forward_bf16(x, all_weights, weight_scores, bias)
    ref_f32 = reference_forward_f32(x, all_weights, weight_scores, bias)

    assert out1.shape == (batch, out_features)
    assert out2.shape == (batch, out_features)
    # Kernel-numerics check (bf16 operands, f32 accumulation).
    assert jnp.allclose(out1, ref_bf16, atol=1e-4, rtol=1e-4), "matmul path mismatch"
    assert jnp.allclose(out2, ref_bf16, atol=1e-4, rtol=1e-4), "select path mismatch"
    assert jnp.allclose(out1, out2, atol=1e-5, rtol=1e-5), "paths disagree"
    # Honest delta vs the pure-f32 torch semantics (bf16 weight/activation rounding only).
    assert jnp.allclose(out1, ref_f32, atol=5e-2, rtol=5e-2), "bf16 drift vs f32 ref"

    print("KERNEL_OK")
</pallas_src>

<mosaic_0001>
module attributes {stable_mosaic.version = 11 : i64} {
  func.func @_matmul_bias_kernel(%arg0: i32, %arg1: i32, %arg2: i32, %arg3: memref<8x128xbf16, #tpu.memory_space<vmem>>, %arg4: memref<128x128xbf16, #tpu.memory_space<vmem>>, %arg5: memref<1x128xf32, #tpu.memory_space<vmem>>, %arg6: memref<8x128xf32, #tpu.memory_space<vmem>>, %arg7: memref<8x128xf32, #tpu.memory_space<vmem>>) attributes {dimension_semantics = [#tpu.dimension_semantics<parallel>, #tpu.dimension_semantics<parallel>, #tpu.dimension_semantics<arbitrary>], iteration_bounds = array<i64: 1, 2, 2>, scalar_prefetch = 0 : i64, scratch_operands = 1 : i64, tpu.core_type = #tpu.core_type<tc>, window_params = [{transform_indices = @transform_0, window_bounds = array<i64: 8, 128>}, {transform_indices = @transform_1, window_bounds = array<i64: 128, 128>}, {transform_indices = @transform_2, window_bounds = array<i64: 1, 128>}, {transform_indices = @transform_3, window_bounds = array<i64: 8, 128>}]} {
    %c0_i32 = arith.constant 0 : i32
    %0 = arith.cmpi eq, %arg2, %c0_i32 : i32
    %1 = arith.extui %0 : i1 to i32
    %c0_i32_0 = arith.constant 0 : i32
    %2 = arith.cmpi ne, %1, %c0_i32_0 : i32
    scf.if %2 {
      %cst_9 = arith.constant 0.000000e+00 : f32
      %12 = vector.broadcast %cst_9 : f32 to vector<8x128xf32>
      %c0_10 = arith.constant 0 : index
      %c0_11 = arith.constant 0 : index
      %13 = vector.load %arg7[%c0_10, %c0_11] : memref<8x128xf32, #tpu.memory_space<vmem>>, vector<8x128xf32>
      tpu.vector_store %arg7[%c0_10, %c0_11], %12 {strides = array<i32>} : memref<8x128xf32, #tpu.memory_space<vmem>>, vector<8x128xf32>,
    } else {
    }
    %c0 = arith.constant 0 : index
    %c0_1 = arith.constant 0 : index
    %3 = vector.load %arg7[%c0, %c0_1] : memref<8x128xf32, #tpu.memory_space<vmem>>, vector<8x128xf32>
    %c0_2 = arith.constant 0 : index
    %c0_3 = arith.constant 0 : index
    %4 = vector.load %arg3[%c0_2, %c0_3] : memref<8x128xbf16, #tpu.memory_space<vmem>>, vector<8x128xbf16>
    %c0_4 = arith.constant 0 : index
    %c0_5 = arith.constant 0 : index
    %5 = vector.load %arg4[%c0_4, %c0_5] : memref<128x128xbf16, #tpu.memory_space<vmem>>, vector<128x128xbf16>
    %cst = arith.constant dense<0.000000e+00> : vector<8x128xf32>
    %6 = tpu.matmul %4, %5, %cst {dimension_numbers = #tpu.dot_dimension_numbers<[1], [0], [0], [1], [0, 0, 1, 1], [], []>} : vector<8x128xbf16>, vector<128x128xbf16>, vector<8x128xf32> -> vector<8x128xf32>
    %7 = arith.addf %3, %6 : vector<8x128xf32>
    %c0_6 = arith.constant 0 : index
    %c0_7 = arith.constant 0 : index
    %8 = vector.load %arg7[%c0_6, %c0_7] : memref<8x128xf32, #tpu.memory_space<vmem>>, vector<8x128xf32>
    tpu.vector_store %arg7[%c0_6, %c0_7], %7 {strides = array<i32>} : memref<8x128xf32, #tpu.memory_space<vmem>>, vector<8x128xf32>,
    %c1_i32 = arith.constant 1 : i32
    %9 = arith.cmpi eq, %arg2, %c1_i32 : i32
    %10 = arith.extui %9 : i1 to i32
    %c0_i32_8 = arith.constant 0 : i32
    %11 = arith.cmpi ne, %10, %c0_i32_8 : i32
    scf.if %11 {
      %c0_9 = arith.constant 0 : index
      %c0_10 = arith.constant 0 : index
      %12 = vector.load %arg7[%c0_9, %c0_10] : memref<8x128xf32, #tpu.memory_space<vmem>>, vector<8x128xf32>
      %c0_11 = arith.constant 0 : index
      %c0_12 = arith.constant 0 : index
      %13 = vector.load %arg5[%c0_11, %c0_12] : memref<1x128xf32, #tpu.memory_space<vmem>>, vector<1x128xf32>
      %14 = vector.broadcast %13 : vector<1x128xf32> to vector<8x128xf32>
      %15 = arith.addf %12, %14 : vector<8x128xf32>
      %c0_13 = arith.constant 0 : index
      %c0_14 = arith.constant 0 : index
      %16 = vector.load %arg6[%c0_13, %c0_14] : memref<8x128xf32, #tpu.memory_space<vmem>>, vector<8x128xf32>
      tpu.vector_store %arg6[%c0_13, %c0_14], %15 {strides = array<i32>} : memref<8x128xf32, #tpu.memory_space<vmem>>, vector<8x128xf32>,
    } else {
    }
    return
  }
  func.func @transform_0(%arg0: i32, %arg1: i32, %arg2: i32) -> (i32, i32) {
    %c0_i32 = arith.constant 0 : i32
    return %arg0, %arg2 : i32, i32
  }
  func.func @transform_1(%arg0: i32, %arg1: i32, %arg2: i32) -> (i32, i32) {
    %c0_i32 = arith.constant 0 : i32
    return %arg2, %arg1 : i32, i32
  }
  func.func @transform_2(%arg0: i32, %arg1: i32, %arg2: i32) -> (i32, i32) {
    %c0_i32 = arith.constant 0 : i32
    %c0_i32_0 = arith.constant 0 : i32
    return %c0_i32, %arg1 : i32, i32
  }
  func.func @transform_3(%arg0: i32, %arg1: i32, %arg2: i32) -> (i32, i32) {
    %c0_i32 = arith.constant 0 : i32
    return %arg0, %arg1 : i32, i32
  }
}

</mosaic_0001>

<llo_original>
// kernel: tpu_custom_call.1
$region0: #{tpu_custom_call.1}
  #allocation0 [shape = 'u32[]', space=smem, size = 0x4, offset = 0x4, fixed_abs, tag = 'smem constant byte address 0x4 - core index']
  #allocation1 [shape = 'u32[144,128]{1,0:T(1,128)}', space=vmem, size = 0x12000, scoped, tag = 'internal scratch']
  #allocation2 [shape = 'f32[8,128]{1,0:T(8,128)}', space=vmem, size = 0x1000, scoped, tag = 'scratch operand']
  %s0 = inlined_call_operand.hbm [shape: bf16[8,256], index: 0, kind: input, shape index: {}]
  %s1 = inlined_call_operand.hbm [shape: bf16[256,256], index: 1, kind: input, shape index: {}]
  %s2 = inlined_call_operand.vmem [shape: f32[1,256], index: 2, kind: input, shape index: {}]
  %s3 = inlined_call_operand.hbm [shape: f32[8,256], index: 3, kind: output, shape index: {}]
  %s4 = sld [smem:[#allocation0]]
  $region61: #{tpu_custom_call.1} parent=0
    _
  %s6 = ssub.s32 1, %s4
  %s7 = scalar_select 0, %s6, %s4
  $region1: #{tpu_custom_call.1} parent=0
    #allocation3 [shape = 'u8[4096]{0}', space=vmem, size = 0x1000, scoped, tag = 'input window, operand 0']
    #allocation4 [shape = 's32[2]{0}', space=sflag, size = 0x8, scoped, tag = 'scoped memory for tpu_custom_call.1']
    #allocation5 [shape = 's32[2]{0}', space=sflag, size = 0x8, scoped, tag = 'scoped memory for tpu_custom_call.1']
    #allocation6 [shape = 'u8[65536]{0}', space=vmem, size = 0x10000, scoped, tag = 'input window, operand 1']
    #allocation7 [shape = 's32[2]{0}', space=sflag, size = 0x8, scoped, tag = 'scoped memory for tpu_custom_call.1']
    #allocation8 [shape = 'u8[8192]{0}', space=vmem, size = 0x2000, scoped, tag = 'output window, operand 0']
    %8 = vsyncpa [#allocation4], 0
    %s9 = scalar_lea.sflag [#allocation4], 1
    %10 = vsyncpa %s9, 0
    %11 = vsyncpa [#allocation7], 0
    %s12 = scalar_lea.sflag [#allocation7], 1
    %13 = vsyncpa %s12, 0
    %14 = vsyncpa [#allocation5], 0
    %s15 = scalar_lea.sflag [#allocation5], 1
    %16 = vsyncpa %s15, 0
    loop: start=0, step=1, limit=6
    $region2: #{tpu_custom_call.1} parent=1 // loop_pre_header
      _
    $region3: #{tpu_custom_call.1} parent=1 // loop_header
      %s18 = sphi 0, %s22
      %p19 = scmp.ge.s32.totalorder %s18, 6
      %s25 = sphi 0, %s44
      %s26 = sphi 0, %s40
      %s27 = sphi 0, %s36
      %s28 = sphi 0, %s25
      %s29 = sphi 0, %s26
      %s30 = sphi 0, %s27
      %s31 = sphi 0, %s28
      %s32 = sphi 0, %s29
      %s33 = sphi 0, %s30
      %s49 = sphi 0, %s51
      %s52 = sphi 0, %s49
      %s53 = sphi 0, %s52
      %s69 = sphi 0, %s53
      %s77 = sphi 0, %s79
      %s80 = sphi 0, %s77
      %s81 = sphi 0, %s80
      %s97 = sphi 0, %s81
      %s103 = sphi 0, %s105
      %s106 = sphi 0, %s103
      %s107 = sphi 0, %s106
      %s123 = sphi 0, %s107
      %s131 = sphi 0, %s133
      %s134 = sphi 0, %s131
      %s135 = sphi 0, %s134
      %s151 = sphi 0, %s135
    $region4: #{tpu_custom_call.1} parent=1 // loop_header_branch
      %21 = sbr.rel (%p19) target = $region8
    $region5: #{tpu_custom_call.1} parent=1 // loop_body
      %s23 = ssub.s32 %s18, 1
      %s24 = ssub.s32 %s18, 2
      %s34 = sadd.s32 1, %s27
      %p35 = scmp.ge.s32.totalorder %s34, 2
      %s36 = scalar_select %p35, 0, %s34
      %s37 = sadd.s32 1, %s26
      %s38 = scalar_select %p35, %s37, %s26
      %p39 = scmp.ge.s32.totalorder %s38, 2
      %s40 = scalar_select %p39, 0, %s38
      %s41 = sadd.s32 1, %s25
      %s42 = scalar_select %p39, %s41, %s25
      %p43 = scmp.ge.s32.totalorder %s42, 1
      %s44 = scalar_select %p43, 0, %s42
      %s45 = ssub.s32 %s25, %s44
      %s46 = ssub.s32 %s27, %s36
      %s47 = sor.u32 %s45, %s46
      %p48 = scmp.eq.s32.totalorder %s47, 0
      %s50 = sadd.s32 %s49, 1
      %s51 = scalar_select %p48, %s49, %s50
      %p54 = pneg %p48
      %p55 = scmp.eq.s32.totalorder %s18, 3
      %p56 = por %p54, %p55
      %p57 = scmp.ne.s32.totalorder %s49, %s52
      %p58 = scmp.eq.s32.totalorder %s18, 0
      %p59 = por %p57, %p58
      %p60 = scmp.ne.s32.totalorder %s49, %s52
      %p61 = scmp.eq.s32.totalorder %s23, 3
      %p62 = por %p60, %p61
      %p63 = scmp.ne.s32.totalorder %s52, %s53
      %p64 = scmp.eq.s32.totalorder %s23, 0
      %p65 = por %p63, %p64
      %p66 = scmp.ne.s32.totalorder %s52, %s53
      %p67 = scmp.eq.s32.totalorder %s24, 3
      %p68 = por %p66, %p67
      %p70 = scmp.ne.s32.totalorder %s53, %s69
      %p71 = scmp.eq.s32.totalorder %s24, 0
      %p72 = por %p70, %p71
      %s73 = ssub.s32 %s27, %s36
      %s74 = ssub.s32 %s26, %s40
      %s75 = sor.u32 %s73, %s74
      %p76 = scmp.eq.s32.totalorder %s75, 0
      %s78 = sadd.s32 %s77, 1
      %s79 = scalar_select %p76, %s77, %s78
      %p82 = pneg %p76
      %p83 = scmp.eq.s32.totalorder %s18, 3
      %p84 = por %p82, %p83
      %p85 = scmp.ne.s32.totalorder %s77, %s80
      %p86 = scmp.eq.s32.totalorder %s18, 0
      %p87 = por %p85, %p86
      %p88 = scmp.ne.s32.totalorder %s77, %s80
      %p89 = scmp.eq.s32.totalorder %s23, 3
      %p90 = por %p88, %p89
      %p91 = scmp.ne.s32.totalorder %s80, %s81
      %p92 = scmp.eq.s32.totalorder %s23, 0
      %p93 = por %p91, %p92
      %p94 = scmp.ne.s32.totalorder %s80, %s81
      %p95 = scmp.eq.s32.totalorder %s24, 3
      %p96 = por %p94, %p95
      %p98 = scmp.ne.s32.totalorder %s81, %s97
      %p99 = scmp.eq.s32.totalorder %s24, 0
      %p100 = por %p98, %p99
      %s101 = ssub.s32 %s26, %s40
      %p102 = scmp.eq.s32.totalorder %s101, 0
      %s104 = sadd.s32 %s103, 1
      %s105 = scalar_select %p102, %s103, %s104
      %p108 = pneg %p102
      %p109 = scmp.eq.s32.totalorder %s18, 3
      %p110 = por %p108, %p109
      %p111 = scmp.ne.s32.totalorder %s103, %s106
      %p112 = scmp.eq.s32.totalorder %s18, 0
      %p113 = por %p111, %p112
      %p114 = scmp.ne.s32.totalorder %s103, %s106
      %p115 = scmp.eq.s32.totalorder %s23, 3
      %p116 = por %p114, %p115
      %p117 = scmp.ne.s32.totalorder %s106, %s107
      %p118 = scmp.eq.s32.totalorder %s23, 0
      %p119 = por %p117, %p118
      %p120 = scmp.ne.s32.totalorder %s106, %s107
      %p121 = scmp.eq.s32.totalorder %s24, 3
      %p122 = por %p120, %p121
      %p124 = scmp.ne.s32.totalorder %s107, %s123
      %p125 = scmp.eq.s32.totalorder %s24, 0
      %p126 = por %p124, %p125
      %s127 = ssub.s32 %s25, %s44
      %s128 = ssub.s32 %s26, %s40
      %s129 = sor.u32 %s127, %s128
      %p130 = scmp.eq.s32.totalorder %s129, 0
      %s132 = sadd.s32 %s131, 1
      %s133 = scalar_select %p130, %s131, %s132
      %p136 = pneg %p130
      %p137 = scmp.eq.s32.totalorder %s18, 3
      %p138 = por %p136, %p137
      %p139 = scmp.ne.s32.totalorder %s131, %s134
      %p140 = scmp.eq.s32.totalorder %s18, 0
      %p141 = por %p139, %p140
      %p142 = scmp.ne.s32.totalorder %s131, %s134
      %p143 = scmp.eq.s32.totalorder %s23, 3
      %p144 = por %p142, %p143
      %p145 = scmp.ne.s32.totalorder %s134, %s135
      %p146 = scmp.eq.s32.totalorder %s23, 0
      %p147 = por %p145, %p146
      %p148 = scmp.ne.s32.totalorder %s134, %s135
      %p149 = scmp.eq.s32.totalorder %s24, 3
      %p150 = por %p148, %p149
      %p152 = scmp.ne.s32.totalorder %s135, %s151
      %p153 = scmp.eq.s32.totalorder %s24, 0
      %p154 = por %p152, %p153
      %p155 = scmp.le.s32.totalorder 1, %s18
      %p156 = scmp.lt.s32.totalorder %s18, 5
      %p157 = pnand %p155, %p156
      %p158 = pneg %p157
      // Predicated region
      $region9: #{tpu_custom_call.1} parent=5 // pred_check
        _
      $region10: #{tpu_custom_call.1} parent=5 // pred_check_branch
        %160 = sbr.rel (%p157) target = $region12
      $region11: #{tpu_custom_call.1} parent=5 // pred_region
        %s161 = ssub.s32 %s18, 1
      $region12: #{tpu_custom_call.1} parent=5 // pred_fallthru
        _
      %p162 = scmp.lt.s32.totalorder %s18, 4
      // Predicated region
      $region13: #{tpu_custom_call.1} parent=5 // pred_check
        %p163 = pneg %p162
      $region14: #{tpu_custom_call.1} parent=5 // pred_check_branch
        %165 = sbr.rel (%p163) target = $region16
      $region15: #{tpu_custom_call.1} parent=5 // pred_region
        // Predicated region
        $region17: #{tpu_custom_call.1} parent=15 // pred_check
          %p166 = pneg %p59
        $region18: #{tpu_custom_call.1} parent=15 // pred_check_branch
          %168 = sbr.rel (%p166) target = $region20
        $region19: #{tpu_custom_call.1} parent=15 // pred_region
          %s169 = sand.u32 %s49, 1
          %s170 = scalar_lea.sflag [#allocation4], %s169
          %s171 = sand.u32 %s49, 1
          %s172 = smul.addr %s171, 4
          %s173 = scalar_lea.vmem [#allocation3], %s172
          %s175 = ssub.s32 64, 64
          %176 = vsyncadd %s170, %s175
          %s177 = smul.addr %s25, 2
          %s178 = sadd.s32 %s27, %s177
          %s179 = smul.addr %s178, 64
          %s180 = scalar_lea.hbm %s0, %s179
          %s182 = sshll.u32 %s173, 4
          %s183 = int_to_ptr.vmem [resolvable:$true] %s182
          %185 = dma.hbm_to_vmem [thread:$0]  %s180, 64, %s183, %s170
        $region20: #{tpu_custom_call.1} parent=15 // pred_fallthru
          _
        // Predicated region
        $region21: #{tpu_custom_call.1} parent=15 // pred_check
          %p186 = pneg %p87
        $region22: #{tpu_custom_call.1} parent=15 // pred_check_branch
          %188 = sbr.rel (%p186) target = $region24
        $region23: #{tpu_custom_call.1} parent=15 // pred_region
          %s189 = sand.u32 %s77, 1
          %s190 = scalar_lea.sflag [#allocation7], %s189
          %s191 = sand.u32 %s77, 1
          %s192 = smul.addr %s191, 64
          %s193 = scalar_lea.vmem [#allocation6], %s192
          %s194 = smul.u32 16, %s27
          %s196 = ssub.s32 1024, 1024
          %197 = vsyncadd %s190, %s196
          %s198 = smul.addr %s194, 2
          %s199 = sadd.s32 %s26, %s198
          %s200 = smul.addr %s199, 64
          %s201 = scalar_lea.hbm %s1, %s200
          %s202 = sshll.u32 %s193, 4
          %s203 = int_to_ptr.vmem [resolvable:$true] %s202
          %208 = dma.hbm_to_vmem [thread:$0]  %s201, 1024, %s203, %s190, 128, 64, 4
        $region24: #{tpu_custom_call.1} parent=15 // pred_fallthru
          _
        // Predicated region
        $region25: #{tpu_custom_call.1} parent=15 // pred_check
          %p209 = pneg %p113
        $region26: #{tpu_custom_call.1} parent=15 // pred_check_branch
          %211 = sbr.rel (%p209) target = $region28
        $region27: #{tpu_custom_call.1} parent=15 // pred_region
          %p212 = scmp.lt.s32.totalorder %s26, 1
          %s213 = scalar_select %p212, %s26, 1
          %s214 = scalar_lea.vmem %s2, %s213
        $region28: #{tpu_custom_call.1} parent=15 // pred_fallthru
          _
      $region16: #{tpu_custom_call.1} parent=5 // pred_fallthru
        _
      %p215 = scmp.le.s32.totalorder 1, %s18
      %p216 = scmp.lt.s32.totalorder %s18, 5
      %p217 = pnand %p215, %p216
      %p218 = pneg %p217
      // Predicated region
      $region29: #{tpu_custom_call.1} parent=5 // pred_check
        _
      $region30: #{tpu_custom_call.1} parent=5 // pred_check_branch
        %220 = sbr.rel (%p217) target = $region32
      $region31: #{tpu_custom_call.1} parent=5 // pred_region
        %s221 = ssub.s32 %s18, 1
        %s222 = sand.u32 %s52, 1
        %s223 = scalar_lea.sflag [#allocation4], %s222
        %s224 = sand.u32 %s52, 1
        %s225 = smul.addr %s224, 4
        %s226 = scalar_lea.vmem [#allocation3], %s225
        // Predicated region
        $region33: #{tpu_custom_call.1} parent=31 // pred_check
          %p227 = pneg %p65
        $region34: #{tpu_custom_call.1} parent=31 // pred_check_branch
          %229 = sbr.rel (%p227) target = $region36
        $region35: #{tpu_custom_call.1} parent=31 // pred_region
          %230 = dma.done %s223, 64
        $region36: #{tpu_custom_call.1} parent=31 // pred_fallthru
          _
        %s231 = sand.u32 %s80, 1
        %s232 = scalar_lea.sflag [#allocation7], %s231
        %s233 = sand.u32 %s80, 1
        %s234 = smul.addr %s233, 64
        %s235 = scalar_lea.vmem [#allocation6], %s234
        // Predicated region
        $region37: #{tpu_custom_call.1} parent=31 // pred_check
          %p236 = pneg %p93
        $region38: #{tpu_custom_call.1} parent=31 // pred_check_branch
          %238 = sbr.rel (%p236) target = $region40
        $region39: #{tpu_custom_call.1} parent=31 // pred_region
          %239 = dma.done %s232, 1024
        $region40: #{tpu_custom_call.1} parent=31 // pred_fallthru
          _
        %s240 = sand.u32 %s52, 1
        %s241 = scalar_lea.sflag [#allocation4], %s240
        %s242 = sand.u32 %s52, 1
        %s243 = smul.addr %s242, 4
        %s244 = scalar_lea.vmem [#allocation3], %s243
        %p245 = pneg %p65
        %p246 = pneg %p62
        %s247 = sand.u32 %s80, 1
        %s248 = scalar_lea.sflag [#allocation7], %s247
        %s249 = sand.u32 %s80, 1
        %s250 = smul.addr %s249, 64
        %s251 = scalar_lea.vmem [#allocation6], %s250
        %p252 = pneg %p93
        %p253 = pneg %p90
        %p254 = scmp.lt.s32.totalorder %s29, 1
        %s255 = scalar_select %p254, %s29, 1
        %s256 = scalar_lea.vmem %s2, %s255
        %p257 = pneg %p119
        %p258 = pneg %p116
        %p259 = pneg %p147
        %p260 = pneg %p144
        %s261 = sand.u32 %s134, 1
        %s262 = scalar_lea.sflag [#allocation5], %s261
        %s263 = sand.u32 %s134, 1
        %s264 = smul.addr %s263, 8
        %s265 = scalar_lea.vmem [#allocation8], %s264
        %s266 = smul.u32 16, %s30
        %p267 = scmp.lt.s32.totalorder %s29, 1
        %s268 = scalar_select %p267, %s29, 1
        %s269 = scalar_lea.vmem %s2, %s268
        %p271 = scmp.eq.s32.totalorder %s30, 0
        // Predicated region
        $region41: #{tpu_custom_call.1} parent=31 // pred_check
          %p272 = pneg %p271
        $region42: #{tpu_custom_call.1} parent=31 // pred_check_branch
          %274 = sbr.rel (%p272) target = $region44
        $region43: #{tpu_custom_call.1} parent=31 // pred_region
          %275 = vst [vmem:[#allocation2] sm:$0xff] 0.0
        $region44: #{tpu_custom_call.1} parent=31 // pred_fallthru
          _
        %v276 = vld [vmem:[#allocation2] sm:$0xff]
        %v277 = vld [vmem:[%s226] sm:$0xf]
        %v278 = vld [vmem:[%s235] sm:$0xf]
        %v279 = vld [vmem:[%s235 + $0x4] sm:$0xf]
        %v280 = vld [vmem:[%s235 + $0x8] sm:$0xf]
        %v281 = vld [vmem:[%s235 + $0xc] sm:$0xf]
        %v282 = vld [vmem:[%s235 + $0x10] sm:$0xf]
        %v283 = vld [vmem:[%s235 + $0x14] sm:$0xf]
        %v284 = vld [vmem:[%s235 + $0x18] sm:$0xf]
        %v285 = vld [vmem:[%s235 + $0x1c] sm:$0xf]
        %v286 = vld [vmem:[%s235 + $0x20] sm:$0xf]
        %v287 = vld [vmem:[%s235 + $0x24] sm:$0xf]
        %v288 = vld [vmem:[%s235 + $0x28] sm:$0xf]
        %v289 = vld [vmem:[%s235 + $0x2c] sm:$0xf]
        %v290 = vld [vmem:[%s235 + $0x30] sm:$0xf]
        %v291 = vld [vmem:[%s235 + $0x34] sm:$0xf]
        %v292 = vld [vmem:[%s235 + $0x38] sm:$0xf]
        %v293 = vld [vmem:[%s235 + $0x3c] sm:$0xf]
        %v310 = vunpack.c.l.b16 %v278
        %v311 = vunpack.c.l.b16 %v279
        %v312 = vunpack.c.l.b16 %v280
        %v313 = vunpack.c.l.b16 %v281
        %v314 = vunpack.c.l.b16 %v282
        %v315 = vunpack.c.l.b16 %v283
        %v316 = vunpack.c.l.b16 %v284
        %v317 = vunpack.c.l.b16 %v285
        %v318 = vunpack.c.l.b16 %v286
        %v319 = vunpack.c.l.b16 %v287
        %v320 = vunpack.c.l.b16 %v288
        %v321 = vunpack.c.l.b16 %v289
        %v322 = vunpack.c.l.b16 %v290
        %v323 = vunpack.c.l.b16 %v291
        %v324 = vunpack.c.l.b16 %v292
        %v325 = vunpack.c.l.b16 %v293
        %v326 = vpack.c.b16 %v311, %v310
        %v327 = vpack.c.b16 %v313, %v312
        %v328 = vpack.c.b16 %v315, %v314
        %v329 = vpack.c.b16 %v317, %v316
        %v330 = vpack.c.b16 %v319, %v318
        %v331 = vpack.c.b16 %v321, %v320
        %v332 = vpack.c.b16 %v323, %v322
        %v333 = vpack.c.b16 %v325, %v324
        %342 = vmatprep.subr.bf16.mxu0 0
        %343 = vmatpush1.bf16.msra.mxu0 %v326
        %344 = vmatprep.subr.bf16.mxu0 0
        %345 = vmatpush1.bf16.msra.mxu0 %v327
        %346 = vmatprep.subr.bf16.mxu0 0
        %347 = vmatpush1.bf16.msra.mxu0 %v328
        %348 = vmatprep.subr.bf16.mxu0 0
        %349 = vmatpush1.bf16.msra.mxu0 %v329
        %350 = vmatprep.subr.bf16.mxu0 0
        %351 = vmatpush1.bf16.msra.mxu0 %v330
        %352 = vmatprep.subr.bf16.mxu0 0
        %353 = vmatpush1.bf16.msra.mxu0 %v331
        %354 = vmatprep.subr.bf16.mxu0 0
        %355 = vmatpush1.bf16.msra.mxu0 %v332
        %356 = vmatprep.subr.bf16.mxu0 0
        %357 = vmatpush1.bf16.msra.mxu0 %v333
        %358 = vmatprep.subr.bf16.mxu0 0
        %359 = vmatpush1.bf16.msra.mxu0 0
        %360 = vmatprep.subr.bf16.mxu0 0
        %361 = vmatpush1.bf16.msra.mxu0 0
        %362 = vmatprep.subr.bf16.mxu0 0
        %363 = vmatpush1.bf16.msra.mxu0 0
        %364 = vmatprep.subr.bf16.mxu0 0
        %365 = vmatpush1.bf16.msra.mxu0 0
        %366 = vmatprep.subr.bf16.mxu0 0
        %367 = vmatpush1.bf16.msra.mxu0 0
        %368 = vmatprep.subr.bf16.mxu0 0
        %369 = vmatpush1.bf16.msra.mxu0 0
        %370 = vmatprep.subr.bf16.mxu0 0
        %371 = vmatpush1.bf16.msra.mxu0 0
        %372 = vmatprep.subr.bf16.mxu0 0
        %373 = vmatpush1.bf16.msra.mxu0 0
        %374 = vmatprep.mubr.bf16.mxu0 0
        %375 = vmatmul.mubr.bf16.gmra.mrb[0].mxu0 %v277
        %v376 = vpop.f32.mrb[0].mxu0
        %v377 = vadd.f32 0.0, %v376
        %v378 = vpop.f32.mrb[0].mxu0
        %v379 = vpop.f32.mrb[0].mxu0
        %v380 = vpop.f32.mrb[0].mxu0
        %381 = vdwg.mxu0
        %v382 = vadd.f32 %v276, %v377
        %383 = vst [vmem:[#allocation2] sm:$0xff] %v382
        %p384 = scmp.eq.s32.totalorder %s30, 1
        // Predicated region
        $region45: #{tpu_custom_call.1} parent=31 // pred_check
          %p385 = pneg %p384
        $region46: #{tpu_custom_call.1} parent=31 // pred_check_branch
          %387 = sbr.rel (%p385) target = $region48
        $region47: #{tpu_custom_call.1} parent=31 // pred_region
          %v388 = vld [vmem:[#allocation2] sm:$0xff]
          %v389 = vld [vmem:[%s269] sm:$0x1]
          %v391 = vlaneseq
          %v392 = vshrl.u32 %v391, 7
          %v393 = vsub.s32 0, %v392
          %v394 = vrot.slane %v389, %v393
          %v396 = vadd.f32 %v388, %v394
          %397 = vst [vmem:[%s265] sm:$0xff] %v396
        $region48: #{tpu_custom_call.1} parent=31 // pred_fallthru
          _
        %s398 = sand.u32 %s134, 1
        %s399 = scalar_lea.sflag [#allocation5], %s398
        %s400 = sand.u32 %s134, 1
        %s401 = smul.addr %s400, 8
        %s402 = scalar_lea.vmem [#allocation8], %s401
        // Predicated region
        $region49: #{tpu_custom_call.1} parent=31 // pred_check
          %p403 = pneg %p144
        $region50: #{tpu_custom_call.1} parent=31 // pred_check_branch
          %405 = sbr.rel (%p403) target = $region52
        $region51: #{tpu_custom_call.1} parent=31 // pred_region
          %s407 = ssub.s32 128, 128
          %408 = vsyncadd %s399, %s407
          %s409 = smul.addr %s28, 2
          %s410 = sadd.s32 %s29, %s409
          %s411 = smul.addr %s410, 128
          %s412 = scalar_lea.hbm %s3, %s411
          %s414 = sshll.u32 %s402, 4
          %s415 = int_to_ptr.vmem [resolvable:$true] %s414
          %417 = dma.vmem_to_hbm [thread:$0]  %s415, 128, %s412, %s399
        $region52: #{tpu_custom_call.1} parent=31 // pred_fallthru
          _
      $region32: #{tpu_custom_call.1} parent=5 // pred_fallthru
        _
      %p418 = scmp.le.s32.totalorder 2, %s18
      // Predicated region
      $region53: #{tpu_custom_call.1} parent=5 // pred_check
        %p419 = pneg %p418
      $region54: #{tpu_custom_call.1} parent=5 // pred_check_branch
        %421 = sbr.rel (%p419) target = $region56
      $region55: #{tpu_custom_call.1} parent=5 // pred_region
        %s422 = ssub.s32 %s18, 2
        // Predicated region
        $region57: #{tpu_custom_call.1} parent=55 // pred_check
          %p423 = pneg %p150
        $region58: #{tpu_custom_call.1} parent=55 // pred_check_branch
          %425 = sbr.rel (%p423) target = $region60
        $region59: #{tpu_custom_call.1} parent=55 // pred_region
          %s426 = sand.u32 %s135, 1
          %s427 = scalar_lea.sflag [#allocation5], %s426
          %s428 = sand.u32 %s135, 1
          %s429 = smul.addr %s428, 8
          %s430 = scalar_lea.vmem [#allocation8], %s429
          %431 = dma.done %s427, 128
        $region60: #{tpu_custom_call.1} parent=55 // pred_fallthru
          _
      $region56: #{tpu_custom_call.1} parent=5 // pred_fallthru
        _
    $region6: #{tpu_custom_call.1} parent=1 // loop_footer
      %s22 = sadd.s32 1, %s18
    $region7: #{tpu_custom_call.1} parent=1 // loop_footer_branch
      %17 = sbr.rel target = $region3
    $region8: #{tpu_custom_call.1} parent=1 // loop_exit
      _
    %432 = vsyncpa [#allocation4], 1
    %s433 = scalar_lea.sflag [#allocation4], 1
    %434 = vsyncpa %s433, 1
    %435 = vsyncpa [#allocation7], 1
    %s436 = scalar_lea.sflag [#allocation7], 1
    %437 = vsyncpa %s436, 1
    %438 = vsyncpa [#allocation5], 1
    %s439 = scalar_lea.sflag [#allocation5], 1
    %440 = vsyncpa %s439, 1

</llo_original>
